<compile_context>
chip_gen: v6e
topology: v6e:2x2x1
jax: 0.10.0
libtpu: 0.0.40
codegen_flags: <defaults>
</compile_context>

<pallas_src>
import jax
import jax.numpy as jnp
import numpy as np
from jax.experimental import pallas as pl
from jax.experimental.pallas import tpu as pltpu

K, S, P, OP = 5, 2, 2, 1  # ConvTranspose2d(kernel_size=5, stride=2, padding=2, output_padding=1)


def _round_up(x, m):
    return (x + m - 1) // m * m


def _make_conv_kernel(TM, W, Cinp, C4p):
    """One program = one batch element x TM consecutive low-res rows (2*TM output rows)."""
    K9 = 9 * Cinp

    def conv_kernel(xp_ref, w_ref, y_ref, stats_ref):
        # xp_ref:   (1, H+2, W+2, Cinp)  bf16  1-padded NHWC input (full batch element, resident over t)
        # w_ref:    (9*Cinp, C4p)        bf16  phase-folded weight: rows (oh, ow, ci), cols (ph, pw, co)
        # y_ref:    (1, 1, TM*W, C4p)    f32   raw matmul result (lane-dense, no relayout)
        # stats_ref:(1, 1, 1, 2*C4p)     f32   per-program partial [sum | sum-of-squares], one row
        t = pl.program_id(1)
        m0 = pl.multiple_of(t * TM, TM)

        # One dynamic read of the TM+2 padded input rows this tile needs.
        window = xp_ref[0, pl.ds(m0, TM + 2), :, :]            # (TM+2, W+2, Cinp)

        # im2col over the shared 3x3 tap window (contraction order: oh, ow, ci).
        parts = [window[oh:oh + TM, ow:ow + W, :]              # (TM, W, Cinp)
                 for oh in range(3) for ow in range(3)]
        patch = jnp.concatenate(parts, axis=-1)                # (TM, W, 9*Cinp)
        patch = patch.reshape(TM * W, K9)                      # merge leading dims (free)

        # Single bf16 MXU matmul, f32 accumulation: all 4 output-parity phases at once.
        acc = jnp.dot(patch, w_ref[...],
                      preferred_element_type=jnp.float32)      # (TM*W, C4p) f32

        # Partial BatchNorm statistics (f32), reduced in the wrapper -> grid stays fully parallel.
        s = jnp.sum(acc, axis=0, keepdims=True)                # (1, C4p)
        sq = jnp.sum(acc * acc, axis=0, keepdims=True)         # (1, C4p)
        stats_ref[0, 0] = jnp.concatenate([s, sq], axis=-1)    # (1, 2*C4p) single lane-dense row

        # Store the matmul result as-is (lane-dense); de-phasing happens once in the wrapper.
        y_ref[0, 0] = acc.astype(y_ref.dtype)

    return conv_kernel


def upblock_forward(x, w_t, b, gamma, beta, eps=1e-5):
    """x: (N, Cin, H, W) f32 NCHW.  w_t: PyTorch ConvTranspose2d weight (Cin, Cout, 5, 5)."""
    N, Cin, H, W = x.shape
    Cout = w_t.shape[1]
    HO, WO = 2 * H, 2 * W
    C4 = 4 * Cout

    # b (ConvTranspose bias) is intentionally unused: training-mode BatchNorm is shift-invariant,
    # so the bias has exactly zero effect on the module output.
    del b

    # Alignment padding: 9*Cinp multiple of 8 (contraction sublanes), C4p multiple of 128 (lanes).
    Cinp = _round_up(Cin, 8)
    C4p = _round_up(C4, 128)
    K9 = 9 * Cinp

    # Low-res row tile: smallest divisor of H with TM*W >= 256 MXU rows (v6e/v7x); else TM = H.
    TM = H
    for cand in range(1, H + 1):
        if H % cand == 0 and cand * W >= 256:
            TM = cand
            break
    T = H // TM

    # ---- input glue: NCHW -> NHWC, 1-pad spatially, zero-pad channels, cast bf16 ----
    x_nhwc = jnp.transpose(x, (0, 2, 3, 1))
    xpad = jnp.pad(x_nhwc, ((0, 0), (1, 1), (1, 1), (0, Cinp - Cin))).astype(jnp.bfloat16)

    # ---- phase-folded im2col weight (9*Cinp, C4p), bf16 ----
    # effective stride-1 weight: flip spatially, swap (in,out) -> (kh, kw, Cin, Cout)
    w_eff = jnp.transpose(jnp.flip(w_t, axis=(2, 3)), (2, 3, 0, 1))
    # For output parity p and padded tap offset o in {0,1,2}: kernel index k = 2*o - p
    # (out-of-range k means the tap is unused for that parity -> weight row stays zero).
    w_tap = jnp.zeros((3, 3, Cinp, 2, 2, Cout), jnp.float32)
    for ph in range(2):
        for oh in range(3):
            kh = 2 * oh - ph
            if not (0 <= kh < K):
                continue
            for pw in range(2):
                for ow in range(3):
                    kw = 2 * ow - pw
                    if not (0 <= kw < K):
                        continue
                    w_tap = w_tap.at[oh, ow, :Cin, ph, pw, :].set(w_eff[kh, kw])
    w_all = w_tap.reshape(K9, C4)
    w_all = jnp.pad(w_all, ((0, 0), (0, C4p - C4))).astype(jnp.bfloat16)

    # ---- single Pallas pass: transposed conv (bf16 MXU) + partial BN stats ----
    conv_out, stats = pl.pallas_call(
        _make_conv_kernel(TM, W, Cinp, C4p),
        out_shape=(jax.ShapeDtypeStruct((N, T, TM * W, C4p), jnp.float32),
                   jax.ShapeDtypeStruct((N, T, 1, 2 * C4p), jnp.float32)),
        grid=(N, T),
        in_specs=[
            # constant in t -> the padded input stays VMEM-resident across the T row tiles
            pl.BlockSpec((1, H + 2, W + 2, Cinp), lambda n, t: (n, 0, 0, 0)),
            pl.BlockSpec((K9, C4p), lambda n, t: (0, 0)),
        ],
        out_specs=(
            pl.BlockSpec((1, 1, TM * W, C4p), lambda n, t: (n, t, 0, 0)),
            pl.BlockSpec((1, 1, 1, 2 * C4p), lambda n, t: (n, t, 0, 0)),
        ),
        compiler_params=pltpu.CompilerParams(
            dimension_semantics=("parallel", "parallel"),
            # Tiny blocks here; set explicitly so the same code keeps double-buffering on v5e's
            # 16 MiB scoped default.  At real channel counts, tile C4p and re-budget for v7x.
            vmem_limit_bytes=32 * 1024 * 1024),
    )(xpad, w_all)

    # ---- BatchNorm2d training-mode statistics (batch mean / biased variance), f32 ----
    cnt = float(N * HO * WO)
    s_all = stats.sum(axis=(0, 1, 2))                                  # (2*C4p,)
    sum_c = s_all[:C4].reshape(4, Cout).sum(axis=0)                    # per-channel sum
    sumsq_c = s_all[C4p:C4p + C4].reshape(4, Cout).sum(axis=0)         # per-channel sum of squares
    mean = sum_c / cnt
    var = sumsq_c / cnt - mean * mean
    scale = gamma / jnp.sqrt(var + eps)
    shift = beta - mean * scale

    # ---- fused affine-BN + ReLU + de-phasing + NHWC->NCHW: ONE wrapper pass (XLA fuses) ----
    scale_row = jnp.tile(scale, 4)                                     # column order (ph, pw, c)
    shift_row = jnp.tile(shift, 4)
    act = jnp.maximum(conv_out[..., :C4] * scale_row + shift_row, 0.0)  # (N, T, TM*W, C4)
    act = act.reshape(N, T, TM, W, 2, 2, Cout)                           # (n, t, m, l, ph, pw, c)
    out = act.transpose(0, 6, 1, 2, 4, 3, 5).reshape(N, Cout, HO, WO)    # 2*(t*TM+m)+ph, 2*l+pw
    return out


def _reference(x, w_t, b, gamma, beta, eps=1e-5):
    """Pure-JAX f32 reference (zero-dilated formulation, bias included), for validation."""
    N, Cin, H, W = x.shape
    Cout = w_t.shape[1]
    HO = (H - 1) * S - 2 * P + K + OP
    WO = (W - 1) * S - 2 * P + K + OP
    x_nhwc = jnp.transpose(x, (0, 2, 3, 1))
    HD, WD = (H - 1) * S + 1, (W - 1) * S + 1
    xd = jnp.zeros((N, HD, WD, Cin), x.dtype).at[:, ::S, ::S, :].set(x_nhwc)
    xp = jnp.pad(xd, ((0, 0), (K - 1 - P, K - 1 - P + OP), (K - 1 - P, K - 1 - P + OP), (0, 0)))
    w_eff = jnp.transpose(jnp.flip(w_t, axis=(2, 3)), (2, 3, 0, 1))
    y = jnp.zeros((N, HO, WO, Cout), jnp.float32)
    for kh in range(K):
        for kw in range(K):
            y = y + jnp.einsum("nhwc,cd->nhwd", xp[:, kh:kh + HO, kw:kw + WO, :], w_eff[kh, kw])
    y = y + b
    mean = jnp.mean(y, axis=(0, 1, 2))
    var = jnp.mean((y - mean) ** 2, axis=(0, 1, 2))
    out = jnp.maximum((y - mean) / jnp.sqrt(var + eps) * gamma + beta, 0.0)
    return jnp.transpose(out, (0, 3, 1, 2))


if __name__ == "__main__":
    key = jax.random.PRNGKey(0)
    k1, k2, k3, k4, k5 = jax.random.split(key, 5)

    N, Cin, Cout, H, W = 2, 4, 8, 16, 16
    x = jax.random.normal(k1, (N, Cin, H, W), jnp.float32)
    # ConvTranspose2d weight shape: (in_c, out_c, kH, kW)
    w_t = jax.random.normal(k2, (Cin, Cout, 5, 5), jnp.float32) * 0.1
    b = jax.random.normal(k3, (Cout,), jnp.float32) * 0.1
    gamma = 1.0 + 0.1 * jax.random.normal(k4, (Cout,), jnp.float32)
    beta = 0.1 * jax.random.normal(k5, (Cout,), jnp.float32)
    # TODO(synk): Dropout branch (dropout=True) not implemented; default module has dropout=False.
    # TODO(synk): BatchNorm running_mean/var buffer updates not modeled (forward output unaffected).

    out = jax.jit(upblock_forward)(x, w_t, b, gamma, beta)
    out = jax.block_until_ready(out)

    ref = _reference(x, w_t, b, gamma, beta)
    # bf16 MXU operands (f32 accumulation) vs the pure-f32 reference -> loosened tolerance.
    np.testing.assert_allclose(np.asarray(out), np.asarray(ref), rtol=3e-2, atol=3e-2)

    assert out.shape == (N, Cout, 32, 32)
    print("KERNEL_OK")
</pallas_src>

<mosaic_0001>
module attributes {stable_mosaic.version = 11 : i64} {
  func.func @conv_kernel(%arg0: i32, %arg1: i32, %arg2: memref<1x18x18x8xbf16, #tpu.memory_space<vmem>>, %arg3: memref<72x128xbf16, #tpu.memory_space<vmem>>, %arg4: memref<1x1x256x128xf32, #tpu.memory_space<vmem>>, %arg5: memref<1x1x1x256xf32, #tpu.memory_space<vmem>>) attributes {dimension_semantics = [#tpu.dimension_semantics<parallel>, #tpu.dimension_semantics<parallel>], iteration_bounds = array<i64: 2, 1>, scalar_prefetch = 0 : i64, scratch_operands = 0 : i64, tpu.core_type = #tpu.core_type<tc>, window_params = [{transform_indices = @transform_0, window_bounds = array<i64: 1, 18, 18, 8>}, {pipeline_mode = #tpu.pipeline_mode<synchronous>, transform_indices = @transform_1, window_bounds = array<i64: 72, 128>}, {transform_indices = @transform_2, window_bounds = array<i64: 1, 1, 256, 128>}, {transform_indices = @transform_3, window_bounds = array<i64: 1, 1, 1, 256>}]} {
    %c16_i32 = arith.constant 16 : i32
    %0 = arith.muli %arg1, %c16_i32 : i32
    %1 = tpu.assume_multiple %0, 16 : i32
    %c0 = arith.constant 0 : index
    %2 = arith.index_cast %1 : i32 to index
    %c0_0 = arith.constant 0 : index
    %c0_1 = arith.constant 0 : index
    %3 = vector.load %arg2[%c0, %2, %c0_0, %c0_1] : memref<1x18x18x8xbf16, #tpu.memory_space<vmem>>, vector<1x18x18x8xbf16>
    %4 = vector.shape_cast %3 : vector<1x18x18x8xbf16> to vector<18x18x8xbf16>
    %5 = vector.extract_strided_slice %4 {offsets = [0, 0, 0], sizes = [16, 16, 8], strides = [1, 1, 1]} : vector<18x18x8xbf16> to vector<16x16x8xbf16>
    %6 = vector.extract_strided_slice %4 {offsets = [0, 1, 0], sizes = [16, 16, 8], strides = [1, 1, 1]} : vector<18x18x8xbf16> to vector<16x16x8xbf16>
    %7 = vector.extract_strided_slice %4 {offsets = [0, 2, 0], sizes = [16, 16, 8], strides = [1, 1, 1]} : vector<18x18x8xbf16> to vector<16x16x8xbf16>
    %8 = vector.extract_strided_slice %4 {offsets = [1, 0, 0], sizes = [16, 16, 8], strides = [1, 1, 1]} : vector<18x18x8xbf16> to vector<16x16x8xbf16>
    %9 = vector.extract_strided_slice %4 {offsets = [1, 1, 0], sizes = [16, 16, 8], strides = [1, 1, 1]} : vector<18x18x8xbf16> to vector<16x16x8xbf16>
    %10 = vector.extract_strided_slice %4 {offsets = [1, 2, 0], sizes = [16, 16, 8], strides = [1, 1, 1]} : vector<18x18x8xbf16> to vector<16x16x8xbf16>
    %11 = vector.extract_strided_slice %4 {offsets = [2, 0, 0], sizes = [16, 16, 8], strides = [1, 1, 1]} : vector<18x18x8xbf16> to vector<16x16x8xbf16>
    %12 = vector.extract_strided_slice %4 {offsets = [2, 1, 0], sizes = [16, 16, 8], strides = [1, 1, 1]} : vector<18x18x8xbf16> to vector<16x16x8xbf16>
    %13 = vector.extract_strided_slice %4 {offsets = [2, 2, 0], sizes = [16, 16, 8], strides = [1, 1, 1]} : vector<18x18x8xbf16> to vector<16x16x8xbf16>
    %14 = tpu.concatenate %5, %6, %7, %8, %9, %10, %11, %12, %13 in 2 : vector<16x16x8xbf16>, vector<16x16x8xbf16>, vector<16x16x8xbf16>, vector<16x16x8xbf16>, vector<16x16x8xbf16>, vector<16x16x8xbf16>, vector<16x16x8xbf16>, vector<16x16x8xbf16>, vector<16x16x8xbf16> -> vector<16x16x72xbf16>
    %15 = vector.shape_cast %14 : vector<16x16x72xbf16> to vector<256x72xbf16>
    %c0_2 = arith.constant 0 : index
    %c0_3 = arith.constant 0 : index
    %16 = vector.load %arg3[%c0_2, %c0_3] : memref<72x128xbf16, #tpu.memory_space<vmem>>, vector<72x128xbf16>
    %cst = arith.constant dense<0.000000e+00> : vector<256x128xf32>
    %17 = tpu.matmul %15, %16, %cst {dimension_numbers = #tpu.dot_dimension_numbers<[1], [0], [0], [1], [0, 0, 1, 1], [], []>} : vector<256x72xbf16>, vector<72x128xbf16>, vector<256x128xf32> -> vector<256x128xf32>
    %cst_4 = arith.constant dense<0.000000e+00> : vector<128xf32>
    %18 = vector.multi_reduction <add>, %17, %cst_4 [0] : vector<256x128xf32> to vector<128xf32>
    %19 = vector.shape_cast %18 : vector<128xf32> to vector<1x128xf32>
    %20 = arith.mulf %17, %17 : vector<256x128xf32>
    %cst_5 = arith.constant dense<0.000000e+00> : vector<128xf32>
    %21 = vector.multi_reduction <add>, %20, %cst_5 [0] : vector<256x128xf32> to vector<128xf32>
    %22 = vector.shape_cast %21 : vector<128xf32> to vector<1x128xf32>
    %23 = tpu.concatenate %19, %22 in 1 : vector<1x128xf32>, vector<1x128xf32> -> vector<1x256xf32>
    %c0_6 = arith.constant 0 : index
    %c0_7 = arith.constant 0 : index
    %c0_8 = arith.constant 0 : index
    %c0_9 = arith.constant 0 : index
    %24 = vector.load %arg5[%c0_6, %c0_7, %c0_8, %c0_9] : memref<1x1x1x256xf32, #tpu.memory_space<vmem>>, vector<1x1x1x256xf32>
    %25 = vector.shape_cast %24 : vector<1x1x1x256xf32> to vector<1x256xf32>
    %26 = vector.shape_cast %23 : vector<1x256xf32> to vector<1x1x1x256xf32>
    tpu.vector_store %arg5[%c0_6, %c0_7, %c0_8, %c0_9], %26 {strides = array<i32>} : memref<1x1x1x256xf32, #tpu.memory_space<vmem>>, vector<1x1x1x256xf32>,
    %c0_10 = arith.constant 0 : index
    %c0_11 = arith.constant 0 : index
    %c0_12 = arith.constant 0 : index
    %c0_13 = arith.constant 0 : index
    %27 = vector.load %arg4[%c0_10, %c0_11, %c0_12, %c0_13] : memref<1x1x256x128xf32, #tpu.memory_space<vmem>>, vector<1x1x256x128xf32>
    %28 = vector.shape_cast %27 : vector<1x1x256x128xf32> to vector<256x128xf32>
    %29 = vector.shape_cast %17 : vector<256x128xf32> to vector<1x1x256x128xf32>
    tpu.vector_store %arg4[%c0_10, %c0_11, %c0_12, %c0_13], %29 {strides = array<i32>} : memref<1x1x256x128xf32, #tpu.memory_space<vmem>>, vector<1x1x256x128xf32>,
    return
  }
  func.func @transform_0(%arg0: i32, %arg1: i32) -> (i32, i32, i32, i32) {
    %c0_i32 = arith.constant 0 : i32
    %c0_i32_0 = arith.constant 0 : i32
    %c0_i32_1 = arith.constant 0 : i32
    %c0_i32_2 = arith.constant 0 : i32
    return %arg0, %c0_i32, %c0_i32_0, %c0_i32_1 : i32, i32, i32, i32
  }
  func.func @transform_1(%arg0: i32, %arg1: i32) -> (i32, i32) {
    %c0_i32 = arith.constant 0 : i32
    %c0_i32_0 = arith.constant 0 : i32
    %c0_i32_1 = arith.constant 0 : i32
    return %c0_i32, %c0_i32_0 : i32, i32
  }
  func.func @transform_2(%arg0: i32, %arg1: i32) -> (i32, i32, i32, i32) {
    %c0_i32 = arith.constant 0 : i32
    %c0_i32_0 = arith.constant 0 : i32
    %c0_i32_1 = arith.constant 0 : i32
    return %arg0, %arg1, %c0_i32, %c0_i32_0 : i32, i32, i32, i32
  }
  func.func @transform_3(%arg0: i32, %arg1: i32) -> (i32, i32, i32, i32) {
    %c0_i32 = arith.constant 0 : i32
    %c0_i32_0 = arith.constant 0 : i32
    %c0_i32_1 = arith.constant 0 : i32
    return %arg0, %arg1, %c0_i32, %c0_i32_0 : i32, i32, i32, i32
  }
}

</mosaic_0001>

<llo_original>
// kernel: tile.17
$region0: #{tile.17}
  #allocation0 [shape = 's32[1]{0}', space=sflag, size = 0x4, scoped, tag = 'scoped memory for tile.17']
  %s0 = inlined_call_operand.vmem [shape: f32[8], index: 0, kind: input, shape index: {}]
  %s1 = inlined_call_operand.vmem [shape: f32[4,8], index: 1, kind: output, shape index: {}]
  // Predicated region
  $region2: #{tile.17} parent=0 // pred_check
    _
  $region3: #{tile.17} parent=0 // pred_check_branch
    %3 = sbr.rel (0) target = $region5
  $region4: #{tile.17} parent=0 // pred_region
    _
  $region5: #{tile.17} parent=0 // pred_fallthru
    _
  %v4 = vld [vmem:[%s0] ss:$0 sm:$0xff]
  %5 = vst [vmem:[%s1] sm:$0xf] %v4

// kernel: upblock_forward.1
$region0: #{upblock_forward.1}
  #allocation0 [shape = 'u32[]', space=smem, size = 0x4, offset = 0x4, fixed_abs, tag = 'smem constant byte address 0x4 - core index']
  #allocation1 [shape = 'u32[144,128]{1,0:T(1,128)}', space=vmem, size = 0x12000, scoped, tag = 'internal scratch']
  %s0 = inlined_call_operand.vmem [shape: bf16[2,18,18,8], index: 0, kind: input, shape index: {}]
  %s1 = inlined_call_operand.vmem [shape: bf16[72,128], index: 1, kind: input, shape index: {}]
  %s2 = inlined_call_operand.vmem [shape: f32[2,1,256,128], index: 2, kind: output, shape index: {0}]
  %s3 = inlined_call_operand.vmem [shape: f32[2,1,1,256], index: 3, kind: output, shape index: {1}]
  %4 = xla_tuple %s2, %s3
  %s5 = sld [smem:[#allocation0]]
  $region49: #{upblock_forward.1} parent=0
    _
  %s7 = ssub.s32 1, %s5
  %s8 = scalar_select 0, %s7, %s5
  loop: start=0, step=1, limit=4
  $region2: #{upblock_forward.1} parent=0 // loop_pre_header
    _
  $region3: #{upblock_forward.1} parent=0 // loop_header
    %s10 = sphi 0, %s14
    %p11 = scmp.ge.s32.totalorder %s10, 4
    %s17 = sphi 0, %s29
    %s18 = sphi 0, %s25
    %s19 = sphi 0, %s17
    %s20 = sphi 0, %s18
    %s21 = sphi 0, %s19
    %s22 = sphi 0, %s20
    %s32 = sphi 0, %s34
    %s35 = sphi 0, %s32
    %s36 = sphi 0, %s35
    %s52 = sphi 0, %s36
    %s56 = sphi 0, %s56
    %s58 = sphi 0, %s56
    %s59 = sphi 0, %s58
    %s73 = sphi 0, %s59
    %s81 = sphi 0, %s83
    %s84 = sphi 0, %s81
    %s85 = sphi 0, %s84
    %s101 = sphi 0, %s85
    %s109 = sphi 0, %s111
    %s112 = sphi 0, %s109
    %s113 = sphi 0, %s112
    %s129 = sphi 0, %s113
  $region4: #{upblock_forward.1} parent=0 // loop_header_branch
    %13 = sbr.rel (%p11) target = $region8
  $region5: #{upblock_forward.1} parent=0 // loop_body
    %s15 = ssub.s32 %s10, 1
    %s16 = ssub.s32 %s10, 2
    %s23 = sadd.s32 1, %s18
    %p24 = scmp.ge.s32.totalorder %s23, 1
    %s25 = scalar_select %p24, 0, %s23
    %s26 = sadd.s32 1, %s17
    %s27 = scalar_select %p24, %s26, %s17
    %p28 = scmp.ge.s32.totalorder %s27, 2
    %s29 = scalar_select %p28, 0, %s27
    %s30 = ssub.s32 %s17, %s29
    %p31 = scmp.eq.s32.totalorder %s30, 0
    %s33 = sadd.s32 %s32, 1
    %s34 = scalar_select %p31, %s32, %s33
    %p37 = pneg %p31
    %p38 = scmp.eq.s32.totalorder %s10, 1
    %p39 = por %p37, %p38
    %p40 = scmp.ne.s32.totalorder %s32, %s35
    %p41 = scmp.eq.s32.totalorder %s10, 0
    %p42 = por %p40, %p41
    %p43 = scmp.ne.s32.totalorder %s32, %s35
    %p44 = scmp.eq.s32.totalorder %s15, 1
    %p45 = por %p43, %p44
    %p46 = scmp.ne.s32.totalorder %s35, %s36
    %p47 = scmp.eq.s32.totalorder %s15, 0
    %p48 = por %p46, %p47
    %p49 = scmp.ne.s32.totalorder %s35, %s36
    %p50 = scmp.eq.s32.totalorder %s16, 1
    %p51 = por %p49, %p50
    %p53 = scmp.ne.s32.totalorder %s36, %s52
    %p54 = scmp.eq.s32.totalorder %s16, 0
    %p55 = por %p53, %p54
    %s57 = sadd.s32 %s56, 1
    %p60 = scmp.eq.s32.totalorder %s10, 1
    %p61 = scmp.ne.s32.totalorder %s56, %s58
    %p62 = scmp.eq.s32.totalorder %s10, 0
    %p63 = por %p61, %p62
    %p64 = scmp.ne.s32.totalorder %s56, %s58
    %p65 = scmp.eq.s32.totalorder %s15, 1
    %p66 = por %p64, %p65
    %p67 = scmp.ne.s32.totalorder %s58, %s59
    %p68 = scmp.eq.s32.totalorder %s15, 0
    %p69 = por %p67, %p68
    %p70 = scmp.ne.s32.totalorder %s58, %s59
    %p71 = scmp.eq.s32.totalorder %s16, 1
    %p72 = por %p70, %p71
    %p74 = scmp.ne.s32.totalorder %s59, %s73
    %p75 = scmp.eq.s32.totalorder %s16, 0
    %p76 = por %p74, %p75
    %s77 = ssub.s32 %s17, %s29
    %s78 = ssub.s32 %s18, %s25
    %s79 = sor.u32 %s77, %s78
    %p80 = scmp.eq.s32.totalorder %s79, 0
    %s82 = sadd.s32 %s81, 1
    %s83 = scalar_select %p80, %s81, %s82
    %p86 = pneg %p80
    %p87 = scmp.eq.s32.totalorder %s10, 1
    %p88 = por %p86, %p87
    %p89 = scmp.ne.s32.totalorder %s81, %s84
    %p90 = scmp.eq.s32.totalorder %s10, 0
    %p91 = por %p89, %p90
    %p92 = scmp.ne.s32.totalorder %s81, %s84
    %p93 = scmp.eq.s32.totalorder %s15, 1
    %p94 = por %p92, %p93
    %p95 = scmp.ne.s32.totalorder %s84, %s85
    %p96 = scmp.eq.s32.totalorder %s15, 0
    %p97 = por %p95, %p96
    %p98 = scmp.ne.s32.totalorder %s84, %s85
    %p99 = scmp.eq.s32.totalorder %s16, 1
    %p100 = por %p98, %p99
    %p102 = scmp.ne.s32.totalorder %s85, %s101
    %p103 = scmp.eq.s32.totalorder %s16, 0
    %p104 = por %p102, %p103
    %s105 = ssub.s32 %s17, %s29
    %s106 = ssub.s32 %s18, %s25
    %s107 = sor.u32 %s105, %s106
    %p108 = scmp.eq.s32.totalorder %s107, 0
    %s110 = sadd.s32 %s109, 1
    %s111 = scalar_select %p108, %s109, %s110
    %p114 = pneg %p108
    %p115 = scmp.eq.s32.totalorder %s10, 1
    %p116 = por %p114, %p115
    %p117 = scmp.ne.s32.totalorder %s109, %s112
    %p118 = scmp.eq.s32.totalorder %s10, 0
    %p119 = por %p117, %p118
    %p120 = scmp.ne.s32.totalorder %s109, %s112
    %p121 = scmp.eq.s32.totalorder %s15, 1
    %p122 = por %p120, %p121
    %p123 = scmp.ne.s32.totalorder %s112, %s113
    %p124 = scmp.eq.s32.totalorder %s15, 0
    %p125 = por %p123, %p124
    %p126 = scmp.ne.s32.totalorder %s112, %s113
    %p127 = scmp.eq.s32.totalorder %s16, 1
    %p128 = por %p126, %p127
    %p130 = scmp.ne.s32.totalorder %s113, %s129
    %p131 = scmp.eq.s32.totalorder %s16, 0
    %p132 = por %p130, %p131
    %p133 = scmp.le.s32.totalorder 1, %s10
    %p134 = scmp.lt.s32.totalorder %s10, 3
    %p135 = pnand %p133, %p134
    %p136 = pneg %p135
    // Predicated region
    $region9: #{upblock_forward.1} parent=5 // pred_check
      _
    $region10: #{upblock_forward.1} parent=5 // pred_check_branch
      %138 = sbr.rel (%p135) target = $region12
    $region11: #{upblock_forward.1} parent=5 // pred_region
      %s139 = ssub.s32 %s10, 1
      // Predicated region
      $region13: #{upblock_forward.1} parent=11 // pred_check
        %p140 = pneg %p69
      $region14: #{upblock_forward.1} parent=11 // pred_check_branch
        %142 = sbr.rel (%p140) target = $region16
      $region15: #{upblock_forward.1} parent=11 // pred_region
        _
      $region16: #{upblock_forward.1} parent=11 // pred_fallthru
        _
    $region12: #{upblock_forward.1} parent=5 // pred_fallthru
      _
    %p143 = scmp.lt.s32.totalorder %s10, 2
    // Predicated region
    $region17: #{upblock_forward.1} parent=5 // pred_check
      %p144 = pneg %p143
    $region18: #{upblock_forward.1} parent=5 // pred_check_branch
      %146 = sbr.rel (%p144) target = $region20
    $region19: #{upblock_forward.1} parent=5 // pred_region
      // Predicated region
      $region21: #{upblock_forward.1} parent=19 // pred_check
        %p147 = pneg %p42
      $region22: #{upblock_forward.1} parent=19 // pred_check_branch
        %149 = sbr.rel (%p147) target = $region24
      $region23: #{upblock_forward.1} parent=19 // pred_region
        %p150 = scmp.lt.s32.totalorder %s17, 1
        %s151 = scalar_select %p150, %s17, 1
        %s152 = smul.addr %s151, 54
        %s153 = smul.addr %s152, 4
        %s154 = scalar_lea.vmem %s0, %s153
      $region24: #{upblock_forward.1} parent=19 // pred_fallthru
        _
    $region20: #{upblock_forward.1} parent=5 // pred_fallthru
      _
    %p155 = scmp.le.s32.totalorder 1, %s10
    %p156 = scmp.lt.s32.totalorder %s10, 3
    %p157 = pnand %p155, %p156
    %p158 = pneg %p157
    // Predicated region
    $region25: #{upblock_forward.1} parent=5 // pred_check
      _
    $region26: #{upblock_forward.1} parent=5 // pred_check_branch
      %160 = sbr.rel (%p157) target = $region28
    $region27: #{upblock_forward.1} parent=5 // pred_region
      %s161 = ssub.s32 %s10, 1
      %p162 = scmp.lt.s32.totalorder %s19, 1
      %s163 = scalar_select %p162, %s19, 1
      %s164 = smul.addr %s163, 54
      %s165 = smul.addr %s164, 4
      %s166 = scalar_lea.vmem %s0, %s165
      %p167 = pneg %p48
      %p168 = pneg %p45
      %p169 = pneg %p69
      %p170 = pneg %p66
      %p171 = pneg %p97
      %p172 = pneg %p94
      %p173 = scmp.lt.s32.totalorder %s19, 1
      %s174 = scalar_select %p173, %s19, 1
      %p175 = scmp.lt.s32.totalorder %s20, 0
      %s176 = scalar_select %p175, %s20, 0
      %s177 = smul.addr %s176, 32
      %s178 = smul.addr %s174, 32
      %s179 = sadd.s32 %s177, %s178
      %s180 = smul.addr %s179, 8
      %s181 = scalar_lea.vmem %s2, %s180
      %p182 = pneg %p125
      %p183 = pneg %p122
      %p184 = scmp.lt.s32.totalorder %s19, 1
      %s185 = scalar_select %p184, %s19, 1
      %p186 = scmp.lt.s32.totalorder %s20, 0
      %s187 = scalar_select %p186, %s20, 0
      %s188 = smul.addr %s187, 2
      %s189 = smul.addr %s185, 2
      %s190 = sadd.s32 %s188, %s189
      %s191 = scalar_lea.vmem %s3, %s190
      %p192 = scmp.lt.s32.totalorder %s19, 1
      %s193 = scalar_select %p192, %s19, 1
      %s194 = smul.addr %s193, 54
      %s195 = smul.addr %s194, 4
      %s196 = scalar_lea.vmem %s0, %s195
      %p197 = scmp.lt.s32.totalorder %s19, 1
      %s198 = scalar_select %p197, %s19, 1
      %p199 = scmp.lt.s32.totalorder %s20, 0
      %s200 = scalar_select %p199, %s20, 0
      %s201 = smul.addr %s200, 32
      %s202 = smul.addr %s198, 32
      %s203 = sadd.s32 %s201, %s202
      %s204 = smul.addr %s203, 8
      %s205 = scalar_lea.vmem %s2, %s204
      %p206 = scmp.lt.s32.totalorder %s19, 1
      %s207 = scalar_select %p206, %s19, 1
      %p208 = scmp.lt.s32.totalorder %s20, 0
      %s209 = scalar_select %p208, %s20, 0
      %s210 = smul.addr %s209, 2
      %s211 = smul.addr %s207, 2
      %s212 = sadd.s32 %s210, %s211
      %s213 = scalar_lea.vmem %s3, %s212
      %s215 = smul.u32 %s20, 16
      %s216 = smul.u32 %s215, 3
      %s217 = smul.addr %s216, 4
      %s218 = scalar_lea.vmem %s196, %s217
      %v219 = vld [vmem:[%s218] sm:$0xf]
      %v220 = vld [vmem:[%s218 + $0x4] sm:$0xf]
      %v221 = vld [vmem:[%s218 + $0x8] sm:$0x1]
      %v222 = vld [vmem:[%s218 + $0xc] sm:$0xf]
      %v223 = vld [vmem:[%s218 + $0x10] sm:$0xf]
      %v224 = vld [vmem:[%s218 + $0x14] sm:$0x1]
      %v225 = vld [vmem:[%s218 + $0x18] sm:$0xf]
      %v226 = vld [vmem:[%s218 + $0x1c] sm:$0xf]
      %v227 = vld [vmem:[%s218 + $0x20] sm:$0x1]
      %v228 = vld [vmem:[%s218 + $0x24] sm:$0xf]
      %v229 = vld [vmem:[%s218 + $0x28] sm:$0xf]
      %v230 = vld [vmem:[%s218 + $0x2c] sm:$0x1]
      %v231 = vld [vmem:[%s218 + $0x30] sm:$0xf]
      %v232 = vld [vmem:[%s218 + $0x34] sm:$0xf]
      %v233 = vld [vmem:[%s218 + $0x38] sm:$0x1]
      %v234 = vld [vmem:[%s218 + $0x3c] sm:$0xf]
      %v235 = vld [vmem:[%s218 + $0x40] sm:$0xf]
      %v236 = vld [vmem:[%s218 + $0x44] sm:$0x1]
      %v237 = vld [vmem:[%s218 + $0x48] sm:$0xf]
      %v238 = vld [vmem:[%s218 + $0x4c] sm:$0xf]
      %v239 = vld [vmem:[%s218 + $0x50] sm:$0x1]
      %v240 = vld [vmem:[%s218 + $0x54] sm:$0xf]
      %v241 = vld [vmem:[%s218 + $0x58] sm:$0xf]
      %v242 = vld [vmem:[%s218 + $0x5c] sm:$0x1]
      %v243 = vld [vmem:[%s218 + $0x60] sm:$0xf]
      %v244 = vld [vmem:[%s218 + $0x64] sm:$0xf]
      %v245 = vld [vmem:[%s218 + $0x68] sm:$0x1]
      %v246 = vld [vmem:[%s218 + $0x6c] sm:$0xf]
      %v247 = vld [vmem:[%s218 + $0x70] sm:$0xf]
      %v248 = vld [vmem:[%s218 + $0x74] sm:$0x1]
      %v249 = vld [vmem:[%s218 + $0x78] sm:$0xf]
      %v250 = vld [vmem:[%s218 + $0x7c] sm:$0xf]
      %v251 = vld [vmem:[%s218 + $0x80] sm:$0x1]
      %v252 = vld [vmem:[%s218 + $0x84] sm:$0xf]
      %v253 = vld [vmem:[%s218 + $0x88] sm:$0xf]
      %v254 = vld [vmem:[%s218 + $0x8c] sm:$0x1]
      %v255 = vld [vmem:[%s218 + $0x90] sm:$0xf]
      %v256 = vld [vmem:[%s218 + $0x94] sm:$0xf]
      %v257 = vld [vmem:[%s218 + $0x98] sm:$0x1]
      %v258 = vld [vmem:[%s218 + $0x9c] sm:$0xf]
      %v259 = vld [vmem:[%s218 + $0xa0] sm:$0xf]
      %v260 = vld [vmem:[%s218 + $0xa4] sm:$0x1]
      %v261 = vld [vmem:[%s218 + $0xa8] sm:$0xf]
      %v262 = vld [vmem:[%s218 + $0xac] sm:$0xf]
      %v263 = vld [vmem:[%s218 + $0xb0] sm:$0x1]
      %v264 = vld [vmem:[%s218 + $0xb4] sm:$0xf]
      %v265 = vld [vmem:[%s218 + $0xb8] sm:$0xf]
      %v266 = vld [vmem:[%s218 + $0xbc] sm:$0x1]
      %v267 = vld [vmem:[%s218 + $0xc0] sm:$0xf]
      %v268 = vld [vmem:[%s218 + $0xc4] sm:$0xf]
      %v269 = vld [vmem:[%s218 + $0xc8] sm:$0x1]
      %v270 = vld [vmem:[%s218 + $0xcc] sm:$0xf]
      %v271 = vld [vmem:[%s218 + $0xd0] sm:$0xf]
      %v272 = vld [vmem:[%s218 + $0xd4] sm:$0x1]
      %v305 = vunpack.c.l.b16 %v219
      %v306 = vunpack.c.l.b16 %v220
      %v307 = vunpack.c.l.b16 %v222
      %v308 = vunpack.c.l.b16 %v223
      %v309 = vunpack.c.l.b16 %v225
      %v310 = vunpack.c.l.b16 %v226
      %v311 = vunpack.c.l.b16 %v228
      %v312 = vunpack.c.l.b16 %v229
      %v313 = vunpack.c.l.b16 %v231
      %v314 = vunpack.c.l.b16 %v232
      %v315 = vunpack.c.l.b16 %v234
      %v316 = vunpack.c.l.b16 %v235
      %v317 = vunpack.c.l.b16 %v237
      %v318 = vunpack.c.l.b16 %v238
      %v319 = vunpack.c.l.b16 %v240
      %v320 = vunpack.c.l.b16 %v241
      %v321 = vunpack.c.l.b16 %v243
      %v322 = vunpack.c.l.b16 %v244
      %v323 = vunpack.c.l.b16 %v246
      %v324 = vunpack.c.l.b16 %v247
      %v325 = vunpack.c.l.b16 %v249
      %v326 = vunpack.c.l.b16 %v250
      %v327 = vunpack.c.l.b16 %v252
      %v328 = vunpack.c.l.b16 %v253
      %v329 = vunpack.c.l.b16 %v255
      %v330 = vunpack.c.l.b16 %v256
      %v331 = vunpack.c.l.b16 %v258
      %v332 = vunpack.c.l.b16 %v259
      %v333 = vunpack.c.l.b16 %v261
      %v334 = vunpack.c.l.b16 %v262
      %v335 = vunpack.c.l.b16 %v264
      %v336 = vunpack.c.l.b16 %v265
      %v337 = vpack.c.b16 %v306, %v305
      %v338 = vpack.c.b16 %v308, %v307
      %v339 = vpack.c.b16 %v310, %v309
      %v340 = vpack.c.b16 %v312, %v311
      %v341 = vpack.c.b16 %v314, %v313
      %v342 = vpack.c.b16 %v316, %v315
      %v343 = vpack.c.b16 %v318, %v317
      %v344 = vpack.c.b16 %v320, %v319
      %v345 = vpack.c.b16 %v322, %v321
      %v346 = vpack.c.b16 %v324, %v323
      %v347 = vpack.c.b16 %v326, %v325
      %v348 = vpack.c.b16 %v328, %v327
      %v349 = vpack.c.b16 %v330, %v329
      %v350 = vpack.c.b16 %v332, %v331
      %v351 = vpack.c.b16 %v334, %v333
      %v352 = vpack.c.b16 %v336, %v335
      %v369 = vunpack.c.l.b16 %v221
      %v370 = vunpack.c.l.b16 %v224
      %v371 = vunpack.c.l.b16 %v227
      %v372 = vunpack.c.l.b16 %v230
      %v373 = vunpack.c.l.b16 %v233
      %v374 = vunpack.c.l.b16 %v236
      %v375 = vunpack.c.l.b16 %v239
      %v376 = vunpack.c.l.b16 %v242
      %v377 = vunpack.c.l.b16 %v245
      %v378 = vunpack.c.l.b16 %v248
      %v379 = vunpack.c.l.b16 %v251
      %v380 = vunpack.c.l.b16 %v254
      %v381 = vunpack.c.l.b16 %v257
      %v382 = vunpack.c.l.b16 %v260
      %v383 = vunpack.c.l.b16 %v263
      %v384 = vunpack.c.l.b16 %v266
      %v385 = vpack.c.b16 %v369, %v369
      %v386 = vpack.c.b16 %v370, %v370
      %v387 = vpack.c.b16 %v371, %v371
      %v388 = vpack.c.b16 %v372, %v372
      %v389 = vpack.c.b16 %v373, %v373
      %v390 = vpack.c.b16 %v374, %v374
      %v391 = vpack.c.b16 %v375, %v375
      %v392 = vpack.c.b16 %v376, %v376
      %v393 = vpack.c.b16 %v377, %v377
      %v394 = vpack.c.b16 %v378, %v378
      %v395 = vpack.c.b16 %v379, %v379
      %v396 = vpack.c.b16 %v380, %v380
      %v397 = vpack.c.b16 %v381, %v381
      %v398 = vpack.c.b16 %v382, %v382
      %v399 = vpack.c.b16 %v383, %v383
      %v400 = vpack.c.b16 %v384, %v384
      %vm401 = vsmask.f32 7424
      %v403 = vshrl.u32 %v337, 16
      %v405 = vshll.u32 %v337, 16
      %v407 = vrot.slane %v405, 1
      %v408 = vor.u32 %v403, %v407
      %v410 = vshll.u32 %v385, 16
      %v412 = vrot.slane %v410, 1
      %v413 = vsel %vm401, %v408, %v412
      %v415 = vshrl.u32 %v338, 16
      %v417 = vshll.u32 %v338, 16
      %v419 = vrot.slane %v417, 1
      %v420 = vor.u32 %v415, %v419
      %v422 = vshll.u32 %v386, 16
      %v424 = vrot.slane %v422, 1
      %v425 = vsel %vm401, %v420, %v424
      %v427 = vshrl.u32 %v339, 16
      %v429 = vshll.u32 %v339, 16
      %v431 = vrot.slane %v429, 1
      %v432 = vor.u32 %v427, %v431
      %v434 = vshll.u32 %v387, 16
      %v436 = vrot.slane %v434, 1
      %v437 = vsel %vm401, %v432, %v436
      %v439 = vshrl.u32 %v340, 16
      %v441 = vshll.u32 %v340, 16
      %v443 = vrot.slane %v441, 1
      %v444 = vor.u32 %v439, %v443
      %v446 = vshll.u32 %v388, 16
      %v448 = vrot.slane %v446, 1
      %v449 = vsel %vm401, %v444, %v448
      %v451 = vshrl.u32 %v341, 16
      %v453 = vshll.u32 %v341, 16
      %v455 = vrot.slane %v453, 1
      %v456 = vor.u32 %v451, %v455
      %v458 = vshll.u32 %v389, 16
      %v460 = vrot.slane %v458, 1
      %v461 = vsel %vm401, %v456, %v460
      %v463 = vshrl.u32 %v342, 16
      %v465 = vshll.u32 %v342, 16
      %v467 = vrot.slane %v465, 1
      %v468 = vor.u32 %v463, %v467
      %v470 = vshll.u32 %v390, 16
      %v472 = vrot.slane %v470, 1
      %v473 = vsel %vm401, %v468, %v472
      %v475 = vshrl.u32 %v343, 16
      %v477 = vshll.u32 %v343, 16
      %v479 = vrot.slane %v477, 1
      %v480 = vor.u32 %v475, %v479
      %v482 = vshll.u32 %v391, 16
      %v484 = vrot.slane %v482, 1
      %v485 = vsel %vm401, %v480, %v484
      %v487 = vshrl.u32 %v344, 16
      %v489 = vshll.u32 %v344, 16
      %v491 = vrot.slane %v489, 1
      %v492 = vor.u32 %v487, %v491
      %v494 = vshll.u32 %v392, 16
      %v496 = vrot.slane %v494, 1
      %v497 = vsel %vm401, %v492, %v496
      %v499 = vshrl.u32 %v345, 16
      %v501 = vshll.u32 %v345, 16
      %v503 = vrot.slane %v501, 1
      %v504 = vor.u32 %v499, %v503
      %v506 = vshll.u32 %v393, 16
      %v508 = vrot.slane %v506, 1
      %v509 = vsel %vm401, %v504, %v508
      %v511 = vshrl.u32 %v346, 16
      %v513 = vshll.u32 %v346, 16
      %v515 = vrot.slane %v513, 1
      %v516 = vor.u32 %v511, %v515
      %v518 = vshll.u32 %v394, 16
      %v520 = vrot.slane %v518, 1
      %v521 = vsel %vm401, %v516, %v520
      %v523 = vshrl.u32 %v347, 16
      %v525 = vshll.u32 %v347, 16
      %v527 = vrot.slane %v525, 1
      %v528 = vor.u32 %v523, %v527
      %v530 = vshll.u32 %v395, 16
      %v532 = vrot.slane %v530, 1
      %v533 = vsel %vm401, %v528, %v532
      %v535 = vshrl.u32 %v348, 16
      %v537 = vshll.u32 %v348, 16
      %v539 = vrot.slane %v537, 1
      %v540 = vor.u32 %v535, %v539
      %v542 = vshll.u32 %v396, 16
      %v544 = vrot.slane %v542, 1
      %v545 = vsel %vm401, %v540, %v544
      %v547 = vshrl.u32 %v349, 16
      %v549 = vshll.u32 %v349, 16
      %v551 = vrot.slane %v549, 1
      %v552 = vor.u32 %v547, %v551
      %v554 = vshll.u32 %v397, 16
      %v556 = vrot.slane %v554, 1
      %v557 = vsel %vm401, %v552, %v556
      %v559 = vshrl.u32 %v350, 16
      %v561 = vshll.u32 %v350, 16
      %v563 = vrot.slane %v561, 1
      %v564 = vor.u32 %v559, %v563
      %v566 = vshll.u32 %v398, 16
      %v568 = vrot.slane %v566, 1
      %v569 = vsel %vm401, %v564, %v568
      %v571 = vshrl.u32 %v351, 16
      %v573 = vshll.u32 %v351, 16
      %v575 = vrot.slane %v573, 1
      %v576 = vor.u32 %v571, %v575
      %v578 = vshll.u32 %v399, 16
      %v580 = vrot.slane %v578, 1
      %v581 = vsel %vm401, %v576, %v580
      %v583 = vshrl.u32 %v352, 16
      %v585 = vshll.u32 %v352, 16
      %v587 = vrot.slane %v585, 1
      %v588 = vor.u32 %v583, %v587
      %v590 = vshll.u32 %v400, 16
      %v592 = vrot.slane %v590, 1
      %v593 = vsel %vm401, %v588, %v592
      %594 = vrot.lane.b32.xlu0 %v413, 8
      %v595 = vpop.permute.xlu0 %594
      %596 = vrot.lane.b32.xlu0 %v425, 8
      %v597 = vpop.permute.xlu0 %596
      %598 = vrot.lane.b32.xlu0 %v437, 8
      %v599 = vpop.permute.xlu0 %598
      %600 = vrot.lane.b32.xlu0 %v449, 8
      %v601 = vpop.permute.xlu0 %600
      %602 = vrot.lane.b32.xlu0 %v461, 8
      %v603 = vpop.permute.xlu0 %602
      %604 = vrot.lane.b32.xlu0 %v473, 8
      %v605 = vpop.permute.xlu0 %604
      %606 = vrot.lane.b32.xlu0 %v485, 8
      %v607 = vpop.permute.xlu0 %606
      %608 = vrot.lane.b32.xlu0 %v497, 8
      %v609 = vpop.permute.xlu0 %608
      %610 = vrot.lane.b32.xlu0 %v509, 8
      %v611 = vpop.permute.xlu0 %610
      %612 = vrot.lane.b32.xlu0 %v521, 8
      %v613 = vpop.permute.xlu0 %612
      %614 = vrot.lane.b32.xlu0 %v533, 8
      %v615 = vpop.permute.xlu0 %614
      %616 = vrot.lane.b32.xlu0 %v545, 8
      %v617 = vpop.permute.xlu0 %616
      %618 = vrot.lane.b32.xlu0 %v557, 8
      %v619 = vpop.permute.xlu0 %618
      %620 = vrot.lane.b32.xlu0 %v569, 8
      %v621 = vpop.permute.xlu0 %620
      %622 = vrot.lane.b32.xlu0 %v581, 8
      %v623 = vpop.permute.xlu0 %622
      %624 = vrot.lane.b32.xlu0 %v593, 8
      %v625 = vpop.permute.xlu0 %624
      %vm626 = vcmask 1046528
      %v627 = vrot.slane %v337, 1
      %v628 = vrot.slane %v385, 1
      %v629 = vsel %vm626, %v627, %v628
      %v630 = vrot.slane %v338, 1
      %v631 = vrot.slane %v386, 1
      %v632 = vsel %vm626, %v630, %v631
      %v633 = vrot.slane %v339, 1
      %v634 = vrot.slane %v387, 1
      %v635 = vsel %vm626, %v633, %v634
      %v636 = vrot.slane %v340, 1
      %v637 = vrot.slane %v388, 1
      %v638 = vsel %vm626, %v636, %v637
      %v639 = vrot.slane %v341, 1
      %v640 = vrot.slane %v389, 1
      %v641 = vsel %vm626, %v639, %v640
      %v642 = vrot.slane %v342, 1
      %v643 = vrot.slane %v390, 1
      %v644 = vsel %vm626, %v642, %v643
      %v645 = vrot.slane %v343, 1
      %v646 = vrot.slane %v391, 1
      %v647 = vsel %vm626, %v645, %v646
      %v648 = vrot.slane %v344, 1
      %v649 = vrot.slane %v392, 1
      %v650 = vsel %vm626, %v648, %v649
      %v651 = vrot.slane %v345, 1
      %v652 = vrot.slane %v393, 1
      %v653 = vsel %vm626, %v651, %v652
      %v654 = vrot.slane %v346, 1
      %v655 = vrot.slane %v394, 1
      %v656 = vsel %vm626, %v654, %v655
      %v657 = vrot.slane %v347, 1
      %v658 = vrot.slane %v395, 1
      %v659 = vsel %vm626, %v657, %v658
      %v660 = vrot.slane %v348, 1
      %v661 = vrot.slane %v396, 1
      %v662 = vsel %vm626, %v660, %v661
      %v663 = vrot.slane %v349, 1
      %v664 = vrot.slane %v397, 1
      %v665 = vsel %vm626, %v663, %v664
      %v666 = vrot.slane %v350, 1
      %v667 = vrot.slane %v398, 1
      %v668 = vsel %vm626, %v666, %v667
      %v669 = vrot.slane %v351, 1
      %v670 = vrot.slane %v399, 1
      %v671 = vsel %vm626, %v669, %v670
      %v672 = vrot.slane %v352, 1
      %v673 = vrot.slane %v400, 1
      %v674 = vsel %vm626, %v672, %v673
      %675 = vrot.lane.b32.xlu0 %v629, 16
      %v676 = vpop.permute.xlu0 %675
      %677 = vrot.lane.b32.xlu0 %v632, 16
      %v678 = vpop.permute.xlu0 %677
      %679 = vrot.lane.b32.xlu0 %v635, 16
      %v680 = vpop.permute.xlu0 %679
      %681 = vrot.lane.b32.xlu0 %v638, 16
      %v682 = vpop.permute.xlu0 %681
      %683 = vrot.lane.b32.xlu0 %v641, 16
      %v684 = vpop.permute.xlu0 %683
      %685 = vrot.lane.b32.xlu0 %v644, 16
      %v686 = vpop.permute.xlu0 %685
      %687 = vrot.lane.b32.xlu0 %v647, 16
      %v688 = vpop.permute.xlu0 %687
      %689 = vrot.lane.b32.xlu0 %v650, 16
      %v690 = vpop.permute.xlu0 %689
      %691 = vrot.lane.b32.xlu0 %v653, 16
      %v692 = vpop.permute.xlu0 %691
      %693 = vrot.lane.b32.xlu0 %v656, 16
      %v694 = vpop.permute.xlu0 %693
      %695 = vrot.lane.b32.xlu0 %v659, 16
      %v696 = vpop.permute.xlu0 %695
      %697 = vrot.lane.b32.xlu0 %v662, 16
      %v698 = vpop.permute.xlu0 %697
      %699 = vrot.lane.b32.xlu0 %v665, 16
      %v700 = vpop.permute.xlu0 %699
      %701 = vrot.lane.b32.xlu0 %v668, 16
      %v702 = vpop.permute.xlu0 %701
      %703 = vrot.lane.b32.xlu0 %v671, 16
      %v704 = vpop.permute.xlu0 %703
      %705 = vrot.lane.b32.xlu0 %v674, 16
      %v706 = vpop.permute.xlu0 %705
      %v709 = vunpack.c.l.b16 %v267
      %v710 = vunpack.c.l.b16 %v268
      %v711 = vpack.c.b16 %v710, %v709
      %712 = vrot.lane.b32.xlu0 %v338, 24
      %v713 = vpop.permute.xlu0 %712
      %714 = vrot.lane.b32.xlu0 %v339, 24
      %v715 = vpop.permute.xlu0 %714
      %716 = vrot.lane.b32.xlu0 %v340, 24
      %v717 = vpop.permute.xlu0 %716
      %718 = vrot.lane.b32.xlu0 %v341, 24
      %v719 = vpop.permute.xlu0 %718
      %720 = vrot.lane.b32.xlu0 %v342, 24
      %v721 = vpop.permute.xlu0 %720
      %722 = vrot.lane.b32.xlu0 %v343, 24
      %v723 = vpop.permute.xlu0 %722
      %724 = vrot.lane.b32.xlu0 %v344, 24
      %v725 = vpop.permute.xlu0 %724
      %726 = vrot.lane.b32.xlu0 %v345, 24
      %v727 = vpop.permute.xlu0 %726
      %728 = vrot.lane.b32.xlu0 %v346, 24
      %v729 = vpop.permute.xlu0 %728
      %730 = vrot.lane.b32.xlu0 %v347, 24
      %v731 = vpop.permute.xlu0 %730
      %732 = vrot.lane.b32.xlu0 %v348, 24
      %v733 = vpop.permute.xlu0 %732
      %734 = vrot.lane.b32.xlu0 %v349, 24
      %v735 = vpop.permute.xlu0 %734
      %736 = vrot.lane.b32.xlu0 %v350, 24
      %v737 = vpop.permute.xlu0 %736
      %738 = vrot.lane.b32.xlu0 %v351, 24
      %v739 = vpop.permute.xlu0 %738
      %740 = vrot.lane.b32.xlu0 %v352, 24
      %v741 = vpop.permute.xlu0 %740
      %742 = vrot.lane.b32.xlu0 %v711, 24
      %v743 = vpop.permute.xlu0 %742
      %v745 = vunpack.c.l.b16 %v269
      %v746 = vpack.c.b16 %v745, %v745
      %v748 = vshrl.u32 %v711, 16
      %v750 = vshll.u32 %v711, 16
      %v752 = vrot.slane %v750, 1
      %v753 = vor.u32 %v748, %v752
      %v755 = vshll.u32 %v746, 16
      %v757 = vrot.slane %v755, 1
      %v758 = vsel %vm401, %v753, %v757
      %759 = vrot.lane.b32.xlu0 %v425, 32
      %v760 = vpop.permute.xlu0 %759
      %761 = vrot.lane.b32.xlu0 %v437, 32
      %v762 = vpop.permute.xlu0 %761
      %763 = vrot.lane.b32.xlu0 %v449, 32
      %v764 = vpop.permute.xlu0 %763
      %765 = vrot.lane.b32.xlu0 %v461, 32
      %v766 = vpop.permute.xlu0 %765
      %767 = vrot.lane.b32.xlu0 %v473, 32
      %v768 = vpop.permute.xlu0 %767
      %769 = vrot.lane.b32.xlu0 %v485, 32
      %v770 = vpop.permute.xlu0 %769
      %771 = vrot.lane.b32.xlu0 %v497, 32
      %v772 = vpop.permute.xlu0 %771
      %773 = vrot.lane.b32.xlu0 %v509, 32
      %v774 = vpop.permute.xlu0 %773
      %775 = vrot.lane.b32.xlu0 %v521, 32
      %v776 = vpop.permute.xlu0 %775
      %777 = vrot.lane.b32.xlu0 %v533, 32
      %v778 = vpop.permute.xlu0 %777
      %779 = vrot.lane.b32.xlu0 %v545, 32
      %v780 = vpop.permute.xlu0 %779
      %781 = vrot.lane.b32.xlu0 %v557, 32
      %v782 = vpop.permute.xlu0 %781
      %783 = vrot.lane.b32.xlu0 %v569, 32
      %v784 = vpop.permute.xlu0 %783
      %785 = vrot.lane.b32.xlu0 %v581, 32
      %v786 = vpop.permute.xlu0 %785
      %787 = vrot.lane.b32.xlu0 %v593, 32
      %v788 = vpop.permute.xlu0 %787
      %789 = vrot.lane.b32.xlu0 %v758, 32
      %v790 = vpop.permute.xlu0 %789
      %v791 = vrot.slane %v711, 1
      %v792 = vrot.slane %v746, 1
      %v793 = vsel %vm626, %v791, %v792
      %794 = vrot.lane.b32.xlu0 %v632, 40
      %v795 = vpop.permute.xlu0 %794
      %796 = vrot.lane.b32.xlu0 %v635, 40
      %v797 = vpop.permute.xlu0 %796
      %798 = vrot.lane.b32.xlu0 %v638, 40
      %v799 = vpop.permute.xlu0 %798
      %800 = vrot.lane.b32.xlu0 %v641, 40
      %v801 = vpop.permute.xlu0 %800
      %802 = vrot.lane.b32.xlu0 %v644, 40
      %v803 = vpop.permute.xlu0 %802
      %804 = vrot.lane.b32.xlu0 %v647, 40
      %v805 = vpop.permute.xlu0 %804
      %806 = vrot.lane.b32.xlu0 %v650, 40
      %v807 = vpop.permute.xlu0 %806
      %808 = vrot.lane.b32.xlu0 %v653, 40
      %v809 = vpop.permute.xlu0 %808
      %810 = vrot.lane.b32.xlu0 %v656, 40
      %v811 = vpop.permute.xlu0 %810
      %812 = vrot.lane.b32.xlu0 %v659, 40
      %v813 = vpop.permute.xlu0 %812
      %814 = vrot.lane.b32.xlu0 %v662, 40
      %v815 = vpop.permute.xlu0 %814
      %816 = vrot.lane.b32.xlu0 %v665, 40
      %v817 = vpop.permute.xlu0 %816
      %818 = vrot.lane.b32.xlu0 %v668, 40
      %v819 = vpop.permute.xlu0 %818
      %820 = vrot.lane.b32.xlu0 %v671, 40
      %v821 = vpop.permute.xlu0 %820
      %822 = vrot.lane.b32.xlu0 %v674, 40
      %v823 = vpop.permute.xlu0 %822
      %824 = vrot.lane.b32.xlu0 %v793, 40
      %v825 = vpop.permute.xlu0 %824
      %v828 = vunpack.c.l.b16 %v270
      %v829 = vunpack.c.l.b16 %v271
      %v830 = vpack.c.b16 %v829, %v828
      %831 = vrot.lane.b32.xlu0 %v339, 48
      %v832 = vpop.permute.xlu0 %831
      %833 = vrot.lane.b32.xlu0 %v340, 48
      %v834 = vpop.permute.xlu0 %833
      %835 = vrot.lane.b32.xlu0 %v341, 48
      %v836 = vpop.permute.xlu0 %835
      %837 = vrot.lane.b32.xlu0 %v342, 48
      %v838 = vpop.permute.xlu0 %837
      %839 = vrot.lane.b32.xlu0 %v343, 48
      %v840 = vpop.permute.xlu0 %839
      %841 = vrot.lane.b32.xlu0 %v344, 48
      %v842 = vpop.permute.xlu0 %841
      %843 = vrot.lane.b32.xlu0 %v345, 48
      %v844 = vpop.permute.xlu0 %843
      %845 = vrot.lane.b32.xlu0 %v346, 48
      %v846 = vpop.permute.xlu0 %845
      %847 = vrot.lane.b32.xlu0 %v347, 48
      %v848 = vpop.permute.xlu0 %847
      %849 = vrot.lane.b32.xlu0 %v348, 48
      %v850 = vpop.permute.xlu0 %849
      %851 = vrot.lane.b32.xlu0 %v349, 48
      %v852 = vpop.permute.xlu0 %851
      %853 = vrot.lane.b32.xlu0 %v350, 48
      %v854 = vpop.permute.xlu0 %853
      %855 = vrot.lane.b32.xlu0 %v351, 48
      %v856 = vpop.permute.xlu0 %855
      %857 = vrot.lane.b32.xlu0 %v352, 48
      %v858 = vpop.permute.xlu0 %857
      %859 = vrot.lane.b32.xlu0 %v711, 48
      %v860 = vpop.permute.xlu0 %859
      %861 = vrot.lane.b32.xlu0 %v830, 48
      %v862 = vpop.permute.xlu0 %861
      %v864 = vunpack.c.l.b16 %v272
      %v865 = vpack.c.b16 %v864, %v864
      %v867 = vshrl.u32 %v830, 16
      %v869 = vshll.u32 %v830, 16
      %v871 = vrot.slane %v869, 1
      %v872 = vor.u32 %v867, %v871
      %v874 = vshll.u32 %v865, 16
      %v876 = vrot.slane %v874, 1
      %v877 = vsel %vm401, %v872, %v876
      %878 = vrot.lane.b32.xlu0 %v437, 56
      %v879 = vpop.permute.xlu0 %878
      %880 = vrot.lane.b32.xlu0 %v449, 56
      %v881 = vpop.permute.xlu0 %880
      %882 = vrot.lane.b32.xlu0 %v461, 56
      %v883 = vpop.permute.xlu0 %882
      %884 = vrot.lane.b32.xlu0 %v473, 56
      %v885 = vpop.permute.xlu0 %884
      %886 = vrot.lane.b32.xlu0 %v485, 56
      %v887 = vpop.permute.xlu0 %886
      %888 = vrot.lane.b32.xlu0 %v497, 56
      %v889 = vpop.permute.xlu0 %888
      %890 = vrot.lane.b32.xlu0 %v509, 56
      %v891 = vpop.permute.xlu0 %890
      %892 = vrot.lane.b32.xlu0 %v521, 56
      %v893 = vpop.permute.xlu0 %892
      %894 = vrot.lane.b32.xlu0 %v533, 56
      %v895 = vpop.permute.xlu0 %894
      %896 = vrot.lane.b32.xlu0 %v545, 56
      %v897 = vpop.permute.xlu0 %896
      %898 = vrot.lane.b32.xlu0 %v557, 56
      %v899 = vpop.permute.xlu0 %898
      %900 = vrot.lane.b32.xlu0 %v569, 56
      %v901 = vpop.permute.xlu0 %900
      %902 = vrot.lane.b32.xlu0 %v581, 56
      %v903 = vpop.permute.xlu0 %902
      %904 = vrot.lane.b32.xlu0 %v593, 56
      %v905 = vpop.permute.xlu0 %904
      %906 = vrot.lane.b32.xlu0 %v758, 56
      %v907 = vpop.permute.xlu0 %906
      %908 = vrot.lane.b32.xlu0 %v877, 56
      %v909 = vpop.permute.xlu0 %908
      %v910 = vrot.slane %v830, 1
      %v911 = vrot.slane %v865, 1
      %v912 = vsel %vm626, %v910, %v911
      %913 = vrot.lane.b32.xlu0 %v635, 64
      %v914 = vpop.permute.xlu0 %913
      %915 = vrot.lane.b32.xlu0 %v638, 64
      %v916 = vpop.permute.xlu0 %915
      %917 = vrot.lane.b32.xlu0 %v641, 64
      %v918 = vpop.permute.xlu0 %917
      %919 = vrot.lane.b32.xlu0 %v644, 64
      %v920 = vpop.permute.xlu0 %919
      %921 = vrot.lane.b32.xlu0 %v647, 64
      %v922 = vpop.permute.xlu0 %921
      %923 = vrot.lane.b32.xlu0 %v650, 64
      %v924 = vpop.permute.xlu0 %923
      %925 = vrot.lane.b32.xlu0 %v653, 64
      %v926 = vpop.permute.xlu0 %925
      %927 = vrot.lane.b32.xlu0 %v656, 64
      %v928 = vpop.permute.xlu0 %927
      %929 = vrot.lane.b32.xlu0 %v659, 64
      %v930 = vpop.permute.xlu0 %929
      %931 = vrot.lane.b32.xlu0 %v662, 64
      %v932 = vpop.permute.xlu0 %931
      %933 = vrot.lane.b32.xlu0 %v665, 64
      %v934 = vpop.permute.xlu0 %933
      %935 = vrot.lane.b32.xlu0 %v668, 64
      %v936 = vpop.permute.xlu0 %935
      %937 = vrot.lane.b32.xlu0 %v671, 64
      %v938 = vpop.permute.xlu0 %937
      %939 = vrot.lane.b32.xlu0 %v674, 64
      %v940 = vpop.permute.xlu0 %939
      %941 = vrot.lane.b32.xlu0 %v793, 64
      %v942 = vpop.permute.xlu0 %941
      %943 = vrot.lane.b32.xlu0 %v912, 64
      %v944 = vpop.permute.xlu0 %943
      %vm945 = vcmask 64512
      %v947 = vsel %vm945, %v337, %v595
      %v949 = vsel %vm945, %v338, %v597
      %v951 = vsel %vm945, %v339, %v599
      %v953 = vsel %vm945, %v340, %v601
      %v955 = vsel %vm945, %v341, %v603
      %v957 = vsel %vm945, %v342, %v605
      %v959 = vsel %vm945, %v343, %v607
      %v961 = vsel %vm945, %v344, %v609
      %v963 = vsel %vm945, %v345, %v611
      %v965 = vsel %vm945, %v346, %v613
      %v967 = vsel %vm945, %v347, %v615
      %v969 = vsel %vm945, %v348, %v617
      %v971 = vsel %vm945, %v349, %v619
      %v973 = vsel %vm945, %v350, %v621
      %v975 = vsel %vm945, %v351, %v623
      %v977 = vsel %vm945, %v352, %v625
      %vm978 = vcmask 130048
      %v980 = vsel %vm978, %v947, %v676
      %v982 = vsel %vm978, %v949, %v678
      %v984 = vsel %vm978, %v951, %v680
      %v986 = vsel %vm978, %v953, %v682
      %v988 = vsel %vm978, %v955, %v684
      %v990 = vsel %vm978, %v957, %v686
      %v992 = vsel %vm978, %v959, %v688
      %v994 = vsel %vm978, %v961, %v690
      %v996 = vsel %vm978, %v963, %v692
      %v998 = vsel %vm978, %v965, %v694
      %v1000 = vsel %vm978, %v967, %v696
      %v1002 = vsel %vm978, %v969, %v698
      %v1004 = vsel %vm978, %v971, %v700
      %v1006 = vsel %vm978, %v973, %v702
      %v1008 = vsel %vm978, %v975, %v704
      %v1010 = vsel %vm978, %v977, %v706
      %vm1011 = vcmask 195584
      %v1013 = vsel %vm1011, %v980, %v713
      %v1015 = vsel %vm1011, %v982, %v715
      %v1017 = vsel %vm1011, %v984, %v717
      %v1019 = vsel %vm1011, %v986, %v719
      %v1021 = vsel %vm1011, %v988, %v721
      %v1023 = vsel %vm1011, %v990, %v723
      %v1025 = vsel %vm1011, %v992, %v725
      %v1027 = vsel %vm1011, %v994, %v727
      %v1029 = vsel %vm1011, %v996, %v729
      %v1031 = vsel %vm1011, %v998, %v731
      %v1033 = vsel %vm1011, %v1000, %v733
      %v1035 = vsel %vm1011, %v1002, %v735
      %v1037 = vsel %vm1011, %v1004, %v737
      %v1039 = vsel %vm1011, %v1006, %v739
      %v1041 = vsel %vm1011, %v1008, %v741
      %v1043 = vsel %vm1011, %v1010, %v743
      %vm1044 = vcmask 261120
      %v1046 = vsel %vm1044, %v1013, %v760
      %v1048 = vsel %vm1044, %v1015, %v762
      %v1050 = vsel %vm1044, %v1017, %v764
      %v1052 = vsel %vm1044, %v1019, %v766
      %v1054 = vsel %vm1044, %v1021, %v768
      %v1056 = vsel %vm1044, %v1023, %v770
      %v1058 = vsel %vm1044, %v1025, %v772
      %v1060 = vsel %vm1044, %v1027, %v774
      %v1062 = vsel %vm1044, %v1029, %v776
      %v1064 = vsel %vm1044, %v1031, %v778
      %v1066 = vsel %vm1044, %v1033, %v780
      %v1068 = vsel %vm1044, %v1035, %v782
      %v1070 = vsel %vm1044, %v1037, %v784
      %v1072 = vsel %vm1044, %v1039, %v786
      %v1074 = vsel %vm1044, %v1041, %v788
      %v1076 = vsel %vm1044, %v1043, %v790
      %vm1077 = vcmask 326656
      %v1079 = vsel %vm1077, %v1046, %v795
      %v1081 = vsel %vm1077, %v1048, %v797
      %v1083 = vsel %vm1077, %v1050, %v799
      %v1085 = vsel %vm1077, %v1052, %v801
      %v1087 = vsel %vm1077, %v1054, %v803
      %v1089 = vsel %vm1077, %v1056, %v805
      %v1091 = vsel %vm1077, %v1058, %v807
      %v1093 = vsel %vm1077, %v1060, %v809
      %v1095 = vsel %vm1077, %v1062, %v811
      %v1097 = vsel %vm1077, %v1064, %v813
      %v1099 = vsel %vm1077, %v1066, %v815
      %v1101 = vsel %vm1077, %v1068, %v817
      %v1103 = vsel %vm1077, %v1070, %v819
      %v1105 = vsel %vm1077, %v1072, %v821
      %v1107 = vsel %vm1077, %v1074, %v823
      %v1109 = vsel %vm1077, %v1076, %v825
      %vm1110 = vcmask 392192
      %v1112 = vsel %vm1110, %v1079, %v832
      %v1114 = vsel %vm1110, %v1081, %v834
      %v1116 = vsel %vm1110, %v1083, %v836
      %v1118 = vsel %vm1110, %v1085, %v838
      %v1120 = vsel %vm1110, %v1087, %v840
      %v1122 = vsel %vm1110, %v1089, %v842
      %v1124 = vsel %vm1110, %v1091, %v844
      %v1126 = vsel %vm1110, %v1093, %v846
      %v1128 = vsel %vm1110, %v1095, %v848
      %v1130 = vsel %vm1110, %v1097, %v850
      %v1132 = vsel %vm1110, %v1099, %v852
      %v1134 = vsel %vm1110, %v1101, %v854
      %v1136 = vsel %vm1110, %v1103, %v856
      %v1138 = vsel %vm1110, %v1105, %v858
      %v1140 = vsel %vm1110, %v1107, %v860
      %v1142 = vsel %vm1110, %v1109, %v862
      %vm1143 = vcmask 457728
      %v1145 = vsel %vm1143, %v1112, %v879
      %v1147 = vsel %vm1143, %v1114, %v881
      %v1149 = vsel %vm1143, %v1116, %v883
      %v1151 = vsel %vm1143, %v1118, %v885
      %v1153 = vsel %vm1143, %v1120, %v887
      %v1155 = vsel %vm1143, %v1122, %v889
      %v1157 = vsel %vm1143, %v1124, %v891
      %v1159 = vsel %vm1143, %v1126, %v893
      %v1161 = vsel %vm1143, %v1128, %v895
      %v1163 = vsel %vm1143, %v1130, %v897
      %v1165 = vsel %vm1143, %v1132, %v899
      %v1167 = vsel %vm1143, %v1134, %v901
      %v1169 = vsel %vm1143, %v1136, %v903
      %v1171 = vsel %vm1143, %v1138, %v905
      %v1173 = vsel %vm1143, %v1140, %v907
      %v1175 = vsel %vm1143, %v1142, %v909
      %vm1176 = vcmask 523264
      %v1178 = vsel %vm1176, %v1145, %v914
      %v1180 = vsel %vm1176, %v1147, %v916
      %v1182 = vsel %vm1176, %v1149, %v918
      %v1184 = vsel %vm1176, %v1151, %v920
      %v1186 = vsel %vm1176, %v1153, %v922
      %v1188 = vsel %vm1176, %v1155, %v924
      %v1190 = vsel %vm1176, %v1157, %v926
      %v1192 = vsel %vm1176, %v1159, %v928
      %v1194 = vsel %vm1176, %v1161, %v930
      %v1196 = vsel %vm1176, %v1163, %v932
      %v1198 = vsel %vm1176, %v1165, %v934
      %v1200 = vsel %vm1176, %v1167, %v936
      %v1202 = vsel %vm1176, %v1169, %v938
      %v1204 = vsel %vm1176, %v1171, %v940
      %v1206 = vsel %vm1176, %v1173, %v942
      %v1208 = vsel %vm1176, %v1175, %v944
      %v1209 = vld [vmem:[%s1] sm:$0xf]
      %v1210 = vld [vmem:[%s1 + $0x4] sm:$0xf]
      %v1211 = vld [vmem:[%s1 + $0x8] sm:$0xf]
      %v1212 = vld [vmem:[%s1 + $0xc] sm:$0xf]
      %v1213 = vld [vmem:[%s1 + $0x10] sm:$0xf]
      %v1214 = vld [vmem:[%s1 + $0x14] sm:$0xf]
      %v1215 = vld [vmem:[%s1 + $0x18] sm:$0xf]
      %v1216 = vld [vmem:[%s1 + $0x1c] sm:$0xf]
      %v1217 = vld [vmem:[%s1 + $0x20] sm:$0xf]
      %v1227 = vunpack.c.l.b16 %v1209
      %v1228 = vunpack.c.l.b16 %v1210
      %v1229 = vunpack.c.l.b16 %v1211
      %v1230 = vunpack.c.l.b16 %v1212
      %v1231 = vunpack.c.l.b16 %v1213
      %v1232 = vunpack.c.l.b16 %v1214
      %v1233 = vunpack.c.l.b16 %v1215
      %v1234 = vunpack.c.l.b16 %v1216
      %v1235 = vunpack.c.l.b16 %v1217
      %v1236 = vpack.c.b16 %v1228, %v1227
      %v1237 = vpack.c.b16 %v1230, %v1229
      %v1238 = vpack.c.b16 %v1232, %v1231
      %v1239 = vpack.c.b16 %v1234, %v1233
      %v1240 = vpack.c.b16 %v1235, %v1235
      %vm1245 = vcmask 588800
      %v1246 = vsel %vm1245, %v1178, 0
      %v1248 = vsel %vm1245, %v1180, 0
      %v1250 = vsel %vm1245, %v1182, 0
      %v1252 = vsel %vm1245, %v1184, 0
      %v1254 = vsel %vm1245, %v1186, 0
      %v1256 = vsel %vm1245, %v1188, 0
      %v1258 = vsel %vm1245, %v1190, 0
      %v1260 = vsel %vm1245, %v1192, 0
      %v1262 = vsel %vm1245, %v1194, 0
      %v1264 = vsel %vm1245, %v1196, 0
      %v1266 = vsel %vm1245, %v1198, 0
      %v1268 = vsel %vm1245, %v1200, 0
      %v1270 = vsel %vm1245, %v1202, 0
      %v1272 = vsel %vm1245, %v1204, 0
      %v1274 = vsel %vm1245, %v1206, 0
      %v1276 = vsel %vm1245, %v1208, 0
      %vm1278 = vcmask 1043456
      %v1280 = vsel %vm1278, %v1240, 0
      %1282 = vmatprep.subr.bf16.mxu0 0
      %1283 = vmatpush1.bf16.msra.mxu0 0
      %1284 = vmatprep.subr.bf16.mxu0 0
      %1285 = vmatpush1.bf16.msra.mxu0 0
      %1286 = vmatprep.subr.bf16.mxu0 0
      %1287 = vmatpush1.bf16.msra.mxu0 0
      %1288 = vmatprep.subr.bf16.mxu0 0
      %1289 = vmatpush1.bf16.msra.mxu0 %v1280
      %1290 = vmatprep.subr.bf16.mxu0 0
      %1291 = vmatpush1.bf16.msra.mxu0 %v1239
      %1292 = vmatprep.subr.bf16.mxu0 0
      %1293 = vmatpush1.bf16.msra.mxu0 %v1238
      %1294 = vmatprep.subr.bf16.mxu0 0
      %1295 = vmatpush1.bf16.msra.mxu0 %v1237
      %1296 = vmatprep.subr.bf16.mxu0 0
      %1297 = vmatpush1.bf16.msra.mxu0 %v1236
      %1298 = vmatprep.subr.bf16.mxu0 0
      %1299 = vmatpush2.bf16.msra.mxu0 0
      %1300 = vmatprep.subr.bf16.mxu0 0
      %1301 = vmatpush2.bf16.msra.mxu0 0
      %1302 = vmatprep.subr.bf16.mxu0 0
      %1303 = vmatpush2.bf16.msra.mxu0 0
      %1304 = vmatprep.subr.bf16.mxu0 0
      %1305 = vmatpush2.bf16.msra.mxu0 0
      %1306 = vmatprep.subr.bf16.mxu0 0
      %1307 = vmatpush2.bf16.msra.mxu0 0
      %1308 = vmatprep.subr.bf16.mxu0 0
      %1309 = vmatpush2.bf16.msra.mxu0 0
      %1310 = vmatprep.subr.bf16.mxu0 0
      %1311 = vmatpush2.bf16.msra.mxu0 0
      %1312 = vmatprep.subr.bf16.mxu0 0
      %1313 = vmatpush2.bf16.msra.mxu0 0
      %1314 = vmatprep.mubr.bf16.mxu0 0
      %1315 = vmatmul.mubr.bf16.gmra.mxu0 %v1246
      %v1316 = vpop.f32.mrf.mxu0
      %v1317 = vadd.f32 0.0, %v1316
      %v1318 = vpop.f32.mrf.mxu0
      %v1319 = vpop.f32.mrf.mxu0
      %v1320 = vadd.f32 0.0, %v1319
      %v1321 = vpop.f32.mrf.mxu0
      %1322 = vmatprep.mubr.bf16.mxu0 0
      %1323 = vmatmul.mubr.bf16.gmra.mxu0 %v1248
      %v1324 = vpop.f32.mrf.mxu0
      %v1325 = vadd.f32 0.0, %v1324
      %v1326 = vpop.f32.mrf.mxu0
      %v1327 = vpop.f32.mrf.mxu0
      %v1328 = vadd.f32 0.0, %v1327
      %v1329 = vpop.f32.mrf.mxu0
      %1330 = vmatprep.mubr.bf16.mxu0 0
      %1331 = vmatmul.mubr.bf16.gmra.mxu0 %v1250
      %v1332 = vpop.f32.mrf.mxu0
      %v1333 = vadd.f32 0.0, %v1332
      %v1334 = vpop.f32.mrf.mxu0
      %v1335 = vpop.f32.mrf.mxu0
      %v1336 = vadd.f32 0.0, %v1335
      %v1337 = vpop.f32.mrf.mxu0
      %1338 = vmatprep.mubr.bf16.mxu0 0
      %1339 = vmatmul.mubr.bf16.gmra.mxu0 %v1252
      %v1340 = vpop.f32.mrf.mxu0
      %v1341 = vadd.f32 0.0, %v1340
      %v1342 = vpop.f32.mrf.mxu0
      %v1343 = vpop.f32.mrf.mxu0
      %v1344 = vadd.f32 0.0, %v1343
      %v1345 = vpop.f32.mrf.mxu0
      %1346 = vmatprep.mubr.bf16.mxu0 0
      %1347 = vmatmul.mubr.bf16.gmra.mxu0 %v1254
      %v1348 = vpop.f32.mrf.mxu0
      %v1349 = vadd.f32 0.0, %v1348
      %v1350 = vpop.f32.mrf.mxu0
      %v1351 = vpop.f32.mrf.mxu0
      %v1352 = vadd.f32 0.0, %v1351
      %v1353 = vpop.f32.mrf.mxu0
      %1354 = vmatprep.mubr.bf16.mxu0 0
      %1355 = vmatmul.mubr.bf16.gmra.mxu0 %v1256
      %v1356 = vpop.f32.mrf.mxu0
      %v1357 = vadd.f32 0.0, %v1356
      %v1358 = vpop.f32.mrf.mxu0
      %v1359 = vpop.f32.mrf.mxu0
      %v1360 = vadd.f32 0.0, %v1359
      %v1361 = vpop.f32.mrf.mxu0
      %1362 = vmatprep.mubr.bf16.mxu0 0
      %1363 = vmatmul.mubr.bf16.gmra.mxu0 %v1258
      %v1364 = vpop.f32.mrf.mxu0
      %v1365 = vadd.f32 0.0, %v1364
      %v1366 = vpop.f32.mrf.mxu0
      %v1367 = vpop.f32.mrf.mxu0
      %v1368 = vadd.f32 0.0, %v1367
      %v1369 = vpop.f32.mrf.mxu0
      %1370 = vmatprep.mubr.bf16.mxu0 0
      %1371 = vmatmul.mubr.bf16.gmra.mxu0 %v1260
      %v1372 = vpop.f32.mrf.mxu0
      %v1373 = vadd.f32 0.0, %v1372
      %v1374 = vpop.f32.mrf.mxu0
      %v1375 = vpop.f32.mrf.mxu0
      %v1376 = vadd.f32 0.0, %v1375
      %v1377 = vpop.f32.mrf.mxu0
      %1378 = vmatprep.mubr.bf16.mxu0 0
      %1379 = vmatmul.mubr.bf16.gmra.mxu0 %v1262
      %v1380 = vpop.f32.mrf.mxu0
      %v1381 = vadd.f32 0.0, %v1380
      %v1382 = vpop.f32.mrf.mxu0
      %v1383 = vpop.f32.mrf.mxu0
      %v1384 = vadd.f32 0.0, %v1383
      %v1385 = vpop.f32.mrf.mxu0
      %1386 = vmatprep.mubr.bf16.mxu0 0
      %1387 = vmatmul.mubr.bf16.gmra.mxu0 %v1264
      %v1388 = vpop.f32.mrf.mxu0
      %v1389 = vadd.f32 0.0, %v1388
      %v1390 = vpop.f32.mrf.mxu0
      %v1391 = vpop.f32.mrf.mxu0
      %v1392 = vadd.f32 0.0, %v1391
      %v1393 = vpop.f32.mrf.mxu0
      %1394 = vmatprep.mubr.bf16.mxu0 0
      %1395 = vmatmul.mubr.bf16.gmra.mxu0 %v1266
      %v1396 = vpop.f32.mrf.mxu0
      %v1397 = vadd.f32 0.0, %v1396
      %v1398 = vpop.f32.mrf.mxu0
      %v1399 = vpop.f32.mrf.mxu0
      %v1400 = vadd.f32 0.0, %v1399
      %v1401 = vpop.f32.mrf.mxu0
      %1402 = vmatprep.mubr.bf16.mxu0 0
      %1403 = vmatmul.mubr.bf16.gmra.mxu0 %v1268
      %v1404 = vpop.f32.mrf.mxu0
      %v1405 = vadd.f32 0.0, %v1404
      %v1406 = vpop.f32.mrf.mxu0
      %v1407 = vpop.f32.mrf.mxu0
      %v1408 = vadd.f32 0.0, %v1407
      %v1409 = vpop.f32.mrf.mxu0
      %1410 = vmatprep.mubr.bf16.mxu0 0
      %1411 = vmatmul.mubr.bf16.gmra.mxu0 %v1270
      %v1412 = vpop.f32.mrf.mxu0
      %v1413 = vadd.f32 0.0, %v1412
      %v1414 = vpop.f32.mrf.mxu0
      %v1415 = vpop.f32.mrf.mxu0
      %v1416 = vadd.f32 0.0, %v1415
      %v1417 = vpop.f32.mrf.mxu0
      %1418 = vmatprep.mubr.bf16.mxu0 0
      %1419 = vmatmul.mubr.bf16.gmra.mxu0 %v1272
      %v1420 = vpop.f32.mrf.mxu0
      %v1421 = vadd.f32 0.0, %v1420
      %v1422 = vpop.f32.mrf.mxu0
      %v1423 = vpop.f32.mrf.mxu0
      %v1424 = vadd.f32 0.0, %v1423
      %v1425 = vpop.f32.mrf.mxu0
      %1426 = vmatprep.mubr.bf16.mxu0 0
      %1427 = vmatmul.mubr.bf16.gmra.mxu0 %v1274
      %v1428 = vpop.f32.mrf.mxu0
      %v1429 = vadd.f32 0.0, %v1428
      %v1430 = vpop.f32.mrf.mxu0
      %v1431 = vpop.f32.mrf.mxu0
      %v1432 = vadd.f32 0.0, %v1431
      %v1433 = vpop.f32.mrf.mxu0
      %1434 = vmatprep.mubr.bf16.mxu0 0
      %1435 = vmatmul.mubr.bf16.gmra.mxu0 %v1276
      %v1436 = vpop.f32.mrf.mxu0
      %v1437 = vadd.f32 0.0, %v1436
      %v1438 = vpop.f32.mrf.mxu0
      %v1439 = vpop.f32.mrf.mxu0
      %v1440 = vadd.f32 0.0, %v1439
      %v1441 = vpop.f32.mrf.mxu0
      %1442 = vdwg.mxu0
      %v1443 = vadd.f32 %v1317, %v1320
      %v1444 = vadd.f32 %v1443, %v1325
      %v1445 = vadd.f32 %v1444, %v1328
      %v1446 = vadd.f32 %v1445, %v1333
      %v1447 = vadd.f32 %v1446, %v1336
      %v1448 = vadd.f32 %v1447, %v1341
      %v1449 = vadd.f32 %v1448, %v1344
      %v1450 = vadd.f32 %v1449, %v1349
      %v1451 = vadd.f32 %v1450, %v1352
      %v1452 = vadd.f32 %v1451, %v1357
      %v1453 = vadd.f32 %v1452, %v1360
      %v1454 = vadd.f32 %v1453, %v1365
      %v1455 = vadd.f32 %v1454, %v1368
      %v1456 = vadd.f32 %v1455, %v1373
      %v1457 = vadd.f32 %v1456, %v1376
      %v1458 = vadd.f32 %v1457, %v1381
      %v1459 = vadd.f32 %v1458, %v1384
      %v1460 = vadd.f32 %v1459, %v1389
      %v1461 = vadd.f32 %v1460, %v1392
      %v1462 = vadd.f32 %v1461, %v1397
      %v1463 = vadd.f32 %v1462, %v1400
      %v1464 = vadd.f32 %v1463, %v1405
      %v1465 = vadd.f32 %v1464, %v1408
      %v1466 = vadd.f32 %v1465, %v1413
      %v1467 = vadd.f32 %v1466, %v1416
      %v1468 = vadd.f32 %v1467, %v1421
      %v1469 = vadd.f32 %v1468, %v1424
      %v1470 = vadd.f32 %v1469, %v1429
      %v1471 = vadd.f32 %v1470, %v1432
      %v1472 = vadd.f32 %v1471, %v1437
      %v1473 = vadd.f32 %v1472, %v1440
      %v1474 = vrot.slane %v1473, 4
      %v1475 = vadd.f32 %v1473, %v1474
      %v1476 = vrot.slane %v1475, 2
      %v1477 = vadd.f32 %v1475, %v1476
      %v1478 = vrot.slane %v1477, 1
      %v1479 = vadd.f32 %v1477, %v1478
      %v1480 = vmul.f32 %v1317, %v1317
      %v1481 = vmul.f32 %v1320, %v1320
      %v1482 = vmul.f32 %v1325, %v1325
      %v1483 = vmul.f32 %v1328, %v1328
      %v1484 = vmul.f32 %v1333, %v1333
      %v1485 = vmul.f32 %v1336, %v1336
      %v1486 = vmul.f32 %v1341, %v1341
      %v1487 = vmul.f32 %v1344, %v1344
      %v1488 = vmul.f32 %v1349, %v1349
      %v1489 = vmul.f32 %v1352, %v1352
      %v1490 = vmul.f32 %v1357, %v1357
      %v1491 = vmul.f32 %v1360, %v1360
      %v1492 = vmul.f32 %v1365, %v1365
      %v1493 = vmul.f32 %v1368, %v1368
      %v1494 = vmul.f32 %v1373, %v1373
      %v1495 = vmul.f32 %v1376, %v1376
      %v1496 = vmul.f32 %v1381, %v1381
      %v1497 = vmul.f32 %v1384, %v1384
      %v1498 = vmul.f32 %v1389, %v1389
      %v1499 = vmul.f32 %v1392, %v1392
      %v1500 = vmul.f32 %v1397, %v1397
      %v1501 = vmul.f32 %v1400, %v1400
      %v1502 = vmul.f32 %v1405, %v1405
      %v1503 = vmul.f32 %v1408, %v1408
      %v1504 = vmul.f32 %v1413, %v1413
      %v1505 = vmul.f32 %v1416, %v1416
      %v1506 = vmul.f32 %v1421, %v1421
      %v1507 = vmul.f32 %v1424, %v1424
      %v1508 = vmul.f32 %v1429, %v1429
      %v1509 = vmul.f32 %v1432, %v1432
      %v1510 = vmul.f32 %v1437, %v1437
      %v1511 = vmul.f32 %v1440, %v1440
      %v1512 = vadd.f32 %v1480, %v1481
      %v1513 = vadd.f32 %v1512, %v1482
      %v1514 = vadd.f32 %v1513, %v1483
      %v1515 = vadd.f32 %v1514, %v1484
      %v1516 = vadd.f32 %v1515, %v1485
      %v1517 = vadd.f32 %v1516, %v1486
      %v1518 = vadd.f32 %v1517, %v1487
      %v1519 = vadd.f32 %v1518, %v1488
      %v1520 = vadd.f32 %v1519, %v1489
      %v1521 = vadd.f32 %v1520, %v1490
      %v1522 = vadd.f32 %v1521, %v1491
      %v1523 = vadd.f32 %v1522, %v1492
      %v1524 = vadd.f32 %v1523, %v1493
      %v1525 = vadd.f32 %v1524, %v1494
      %v1526 = vadd.f32 %v1525, %v1495
      %v1527 = vadd.f32 %v1526, %v1496
      %v1528 = vadd.f32 %v1527, %v1497
      %v1529 = vadd.f32 %v1528, %v1498
      %v1530 = vadd.f32 %v1529, %v1499
      %v1531 = vadd.f32 %v1530, %v1500
      %v1532 = vadd.f32 %v1531, %v1501
      %v1533 = vadd.f32 %v1532, %v1502
      %v1534 = vadd.f32 %v1533, %v1503
      %v1535 = vadd.f32 %v1534, %v1504
      %v1536 = vadd.f32 %v1535, %v1505
      %v1537 = vadd.f32 %v1536, %v1506
      %v1538 = vadd.f32 %v1537, %v1507
      %v1539 = vadd.f32 %v1538, %v1508
      %v1540 = vadd.f32 %v1539, %v1509
      %v1541 = vadd.f32 %v1540, %v1510
      %v1542 = vadd.f32 %v1541, %v1511
      %v1543 = vrot.slane %v1542, 4
      %v1544 = vadd.f32 %v1542, %v1543
      %v1545 = vrot.slane %v1544, 2
      %v1546 = vadd.f32 %v1544, %v1545
      %v1547 = vrot.slane %v1546, 1
      %v1548 = vadd.f32 %v1546, %v1547
      %v1551 = vcombine.low %v1479, %v1548
      %v1553 = vunpack.c.l.s4 1966171168
      %v1554 = vunpack.c.0.s8 %v1553
      %v1555 = vlaneseq
      %v1556 = vshrl.u32 %v1555, 7
      %v1557 = vsub.s32 %v1554, %v1556
      %v1558 = vrot.slane %v1551, %v1557
      %v1560 = vunpack.c.l.s4 1966171168
      %v1561 = vunpack.c.0.s8 %v1560
      %v1562 = vlaneseq
      %v1563 = vshrl.u32 %v1562, 7
      %v1564 = vsub.s32 %v1561, %v1563
      %v1565 = vrot.slane %v1558, %v1564
      %v1567 = vlaneseq
      %vm1568 = vcmp.ge.s32.totalorder %v1567, 0
      %vm1569 = vcmp.lt.s32.totalorder %v1567, 256
      %vm1570 = vmand %vm1568, %vm1569
      %1571 = vst.msk [vmem:[%s213] sm:$0x3] %vm1570, %v1565
      %1572 = vst [vmem:[%s205] sm:$0xff] %v1317
      %1573 = vst [vmem:[%s205 + $0x8] sm:$0xff] %v1320
      %1574 = vst [vmem:[%s205 + $0x10] sm:$0xff] %v1325
      %1575 = vst [vmem:[%s205 + $0x18] sm:$0xff] %v1328
      %1576 = vst [vmem:[%s205 + $0x20] sm:$0xff] %v1333
      %1577 = vst [vmem:[%s205 + $0x28] sm:$0xff] %v1336
      %1578 = vst [vmem:[%s205 + $0x30] sm:$0xff] %v1341
      %1579 = vst [vmem:[%s205 + $0x38] sm:$0xff] %v1344
      %1580 = vst [vmem:[%s205 + $0x40] sm:$0xff] %v1349
      %1581 = vst [vmem:[%s205 + $0x48] sm:$0xff] %v1352
      %1582 = vst [vmem:[%s205 + $0x50] sm:$0xff] %v1357
      %1583 = vst [vmem:[%s205 + $0x58] sm:$0xff] %v1360
      %1584 = vst [vmem:[%s205 + $0x60] sm:$0xff] %v1365
      %1585 = vst [vmem:[%s205 + $0x68] sm:$0xff] %v1368
      %1586 = vst [vmem:[%s205 + $0x70] sm:$0xff] %v1373
      %1587 = vst [vmem:[%s205 + $0x78] sm:$0xff] %v1376
      %1588 = vst [vmem:[%s205 + $0x80] sm:$0xff] %v1381
      %1589 = vst [vmem:[%s205 + $0x88] sm:$0xff] %v1384
      %1590 = vst [vmem:[%s205 + $0x90] sm:$0xff] %v1389
      %1591 = vst [vmem:[%s205 + $0x98] sm:$0xff] %v1392
      %1592 = vst [vmem:[%s205 + $0xa0] sm:$0xff] %v1397
      %1593 = vst [vmem:[%s205 + $0xa8] sm:$0xff] %v1400
      %1594 = vst [vmem:[%s205 + $0xb0] sm:$0xff] %v1405
      %1595 = vst [vmem:[%s205 + $0xb8] sm:$0xff] %v1408
      %1596 = vst [vmem:[%s205 + $0xc0] sm:$0xff] %v1413
      %1597 = vst [vmem:[%s205 + $0xc8] sm:$0xff] %v1416
      %1598 = vst [vmem:[%s205 + $0xd0] sm:$0xff] %v1421
      %1599 = vst [vmem:[%s205 + $0xd8] sm:$0xff] %v1424
      %1600 = vst [vmem:[%s205 + $0xe0] sm:$0xff] %v1429
      %1601 = vst [vmem:[%s205 + $0xe8] sm:$0xff] %v1432
      %1602 = vst [vmem:[%s205 + $0xf0] sm:$0xff] %v1437
      %1603 = vst [vmem:[%s205 + $0xf8] sm:$0xff] %v1440
      %p1604 = scmp.lt.s32.totalorder %s19, 1
      %s1605 = scalar_select %p1604, %s19, 1
      %p1606 = scmp.lt.s32.totalorder %s20, 0
      %s1607 = scalar_select %p1606, %s20, 0
      %s1608 = smul.addr %s1607, 32
      %s1609 = smul.addr %s1605, 32
      %s1610 = sadd.s32 %s1608, %s1609
      %s1611 = smul.addr %s1610, 8
      %s1612 = scalar_lea.vmem %s2, %s1611
      %p1613 = scmp.lt.s32.totalorder %s19, 1
      %s1614 = scalar_select %p1613, %s19, 1
      %p1615 = scmp.lt.s32.totalorder %s20, 0
      %s1616 = scalar_select %p1615, %s20, 0
      %s1617 = smul.addr %s1616, 2
      %s1618 = smul.addr %s1614, 2
      %s1619 = sadd.s32 %s1617, %s1618
      %s1620 = scalar_lea.vmem %s3, %s1619
      // Predicated region
      $region29: #{upblock_forward.1} parent=27 // pred_check
        %p1621 = pneg %p94
      $region30: #{upblock_forward.1} parent=27 // pred_check_branch
        %1623 = sbr.rel (%p1621) target = $region32
      $region31: #{upblock_forward.1} parent=27 // pred_region
        _
      $region32: #{upblock_forward.1} parent=27 // pred_fallthru
        _
      // Predicated region
      $region33: #{upblock_forward.1} parent=27 // pred_check
        %p1624 = pneg %p122
      $region34: #{upblock_forward.1} parent=27 // pred_check_branch
        %1626 = sbr.rel (%p1624) target = $region36
      $region35: #{upblock_forward.1} parent=27 // pred_region
        _
      $region36: #{upblock_forward.1} parent=27 // pred_fallthru
        _
    $region28: #{upblock_forward.1} parent=5 // pred_fallthru
      _
    %p1627 = scmp.le.s32.totalorder 2, %s10
    // Predicated region
    $region37: #{upblock_forward.1} parent=5 // pred_check
      %p1628 = pneg %p1627
    $region38: #{upblock_forward.1} parent=5 // pred_check_branch
      %1630 = sbr.rel (%p1628) target = $region40
    $region39: #{upblock_forward.1} parent=5 // pred_region
      %s1631 = ssub.s32 %s10, 2
      // Predicated region
      $region41: #{upblock_forward.1} parent=39 // pred_check
        %p1632 = pneg %p100
      $region42: #{upblock_forward.1} parent=39 // pred_check_branch
        %1634 = sbr.rel (%p1632) target = $region44
      $region43: #{upblock_forward.1} parent=39 // pred_region
        %p1635 = scmp.lt.s32.totalorder %s21, 1
        %s1636 = scalar_select %p1635, %s21, 1
        %p1637 = scmp.lt.s32.totalorder %s22, 0
        %s1638 = scalar_select %p1637, %s22, 0
        %s1639 = smul.addr %s1638, 32
        %s1640 = smul.addr %s1636, 32
        %s1641 = sadd.s32 %s1639, %s1640
        %s1642 = smul.addr %s1641, 8
        %s1643 = scalar_lea.vmem %s2, %s1642
      $region44: #{upblock_forward.1} parent=39 // pred_fallthru
        _
      // Predicated region
      $region45: #{upblock_forward.1} parent=39 // pred_check
        %p1644 = pneg %p128
      $region46: #{upblock_forward.1} parent=39 // pred_check_branch
        %1646 = sbr.rel (%p1644) target = $region48
      $region47: #{upblock_forward.1} parent=39 // pred_region
        %p1647 = scmp.lt.s32.totalorder %s21, 1
        %s1648 = scalar_select %p1647, %s21, 1
        %p1649 = scmp.lt.s32.totalorder %s22, 0
        %s1650 = scalar_select %p1649, %s22, 0
        %s1651 = smul.addr %s1650, 2
        %s1652 = smul.addr %s1648, 2
        %s1653 = sadd.s32 %s1651, %s1652
        %s1654 = scalar_lea.vmem %s3, %s1653
      $region48: #{upblock_forward.1} parent=39 // pred_fallthru
        _
    $region40: #{upblock_forward.1} parent=5 // pred_fallthru
      _
  $region6: #{upblock_forward.1} parent=0 // loop_footer
    %s14 = sadd.s32 1, %s10
  $region7: #{upblock_forward.1} parent=0 // loop_footer_branch
    %9 = sbr.rel target = $region3
  $region8: #{upblock_forward.1} parent=0 // loop_exit
    _

</llo_original>
